<compile_context>
chip_gen: v7x
topology: tpu7x:2x2x1
jax: 0.10.0
libtpu: 0.0.40
codegen_flags: <defaults>
</compile_context>

<pallas_src>
import jax
import jax.numpy as jnp
from jax import lax
from jax.experimental import pallas as pl
from jax.experimental.pallas import tpu as pltpu

HIDDEN = 32        # hidden_dim of the nn.LSTM in the module (default)
INPUT_DIM = 1      # input_dim (default; forward unsqueezes 2-D input to this)
NUM_HEADS = 3      # [sigma, peak, stop]


def _lstm_heads_kernel(
    x_ref,        # (Bb, T)   dense 2-D sequence block (I==1 squeezed)
    wih_ref,      # (1, 4H)   weight_ih_l0^T  (input_dim == 1)
    whh_ref,      # (H, 4H)   weight_hh_l0^T
    b_ref,        # (1, 4H)   bias_ih_l0 + bias_hh_l0
    hw_ref,       # (H, 3)    [fc_sigma.w | fc_peak.w | fc_stop.w]^T fused
    hb_ref,       # (1, 3)    fused head biases
    out_ref,      # (Bb, 3)   [sigma, peak, stop_prob]
):
    Bb, T = x_ref.shape
    H = whh_ref.shape[0]

    x = x_ref[...]            # (Bb, T)  dense, no lane-padding waste
    wih = wih_ref[...]        # (1, 4H)
    bias = b_ref[...]         # (1, 4H)
    whh = whh_ref[...]        # (H, 4H)  loop invariant

    # Hoisted input projection, kept in vregs (no VMEM scratch): one
    # lane-broadcast VPU multiply per timestep.  It does not depend on h/c,
    # so the scheduler is free to overlap it with the recurrence's MXU work.
    gx = [x[:, t:t + 1] * wih + bias for t in range(T)]     # T x (Bb, 4H)

    # Serial LSTM recurrence, fully unrolled with static t; h/c stay in vregs.
    # TODO(synk): for long sequences (T >> a few hundred) add a T-chunk grid
    #   axis ("arbitrary") carrying h/c in a small VMEM scratch instead of a
    #   full static unroll, to bound instruction count and VMEM.
    # TODO(synk): hold Whh resident in the MXU across the recurrence
    #   (pltpu.matmul_push_rhs / matmul_acc_lhs / matmul_pop) instead of
    #   re-pushing the RHS with jnp.dot every step.
    h = jnp.zeros((Bb, H), jnp.float32)
    c = jnp.zeros((Bb, H), jnp.float32)
    for t in range(T):
        gates = gx[t] + jnp.dot(h, whh, preferred_element_type=jnp.float32)
        sig = jax.nn.sigmoid(gates)          # one EUP pass over all 4H lanes
        i_g = sig[:, 0 * H:1 * H]
        f_g = sig[:, 1 * H:2 * H]
        o_g = sig[:, 3 * H:4 * H]
        g_g = jnp.tanh(gates[:, 2 * H:3 * H])
        c = f_g * c + i_g * g_g
        h = o_g * jnp.tanh(c)

    # Fused heads: one (Bb, H) @ (H, 3) matmul; sigmoid only on the stop
    # column, selected with an iota mask so the block is written in one store.
    heads = (jnp.dot(h, hw_ref[...], preferred_element_type=jnp.float32)
             + hb_ref[...])                                  # (Bb, 3)
    col = lax.broadcasted_iota(jnp.int32, heads.shape, 1)
    out_ref[...] = jnp.where(col == NUM_HEADS - 1, jax.nn.sigmoid(heads), heads)


def _default_batch_block(B):
    """Give the 'parallel' grid axis >= 2 blocks on v7x (two TensorCores);
    keep a single block on single-TC v5e/v6e (extra grid steps only add
    ~0.35us of pipeline overhead there)."""
    try:
        kind = jax.devices()[0].device_kind.lower()
        two_tc = ("v7" in kind) or ("7x" in kind)
    except Exception:
        two_tc = False
    if two_tc and B >= 16 and (B // 2) % 8 == 0:
        return B // 2
    return B


def gaussian_param_and_stop_forward(x, params, *, batch_block=None):
    """x: (B, T) or (B, T, 1) float -> (sigma, peak, stop_prob), each (B,)."""
    if x.ndim == 3:
        # TODO(synk): general input_dim > 1 path (module default is 1).
        assert x.shape[-1] == 1, "kernel implements the module default input_dim=1"
        x = x[..., 0]
    x = x.astype(jnp.float32)                 # (B, T): dense layout, no transpose
    B, T = x.shape
    wih_t, whh_t, bias, heads_w, heads_b = params

    if batch_block is None:
        batch_block = _default_batch_block(B)
    assert B % batch_block == 0
    # batch is the sublane dim of the x block: full B, or a multiple of 8.
    assert batch_block == B or batch_block % 8 == 0
    nb = B // batch_block

    full = lambda arr: pl.BlockSpec(arr.shape, lambda b: (0,) * arr.ndim)

    out = pl.pallas_call(
        _lstm_heads_kernel,
        out_shape=jax.ShapeDtypeStruct((B, NUM_HEADS), jnp.float32),
        grid=(nb,),
        in_specs=[
            pl.BlockSpec((batch_block, T), lambda b: (b, 0)),
            full(wih_t), full(whh_t), full(bias),
            full(heads_w), full(heads_b),
        ],
        out_specs=pl.BlockSpec((batch_block, NUM_HEADS), lambda b: (b, 0)),
        compiler_params=pltpu.CompilerParams(
            # Independent batch blocks -> shardable across TCs on v7x.
            dimension_semantics=("parallel",),
            # Above v5e's 16 MiB default scoped limit, below v7x's 64 MiB
            # physical VMEM; ample for the dense (Bb, T) block + tiny weights.
            vmem_limit_bytes=32 * 1024 * 1024,
        ),
    )(x, wih_t, whh_t, bias, heads_w, heads_b)

    return out[:, 0], out[:, 1], out[:, 2]


def init_params(key, input_dim=INPUT_DIM, hidden_dim=HIDDEN):
    """Deterministic init mirroring PyTorch default uniform bounds."""
    H = hidden_dim
    ks = jax.random.split(key, 10)
    u = lambda k, shape, bound: jax.random.uniform(
        k, shape, jnp.float32, minval=-bound, maxval=bound)

    lstm_b = 1.0 / (H ** 0.5)
    w_ih = u(ks[0], (4 * H, input_dim), lstm_b)   # gate order: i, f, g, o
    w_hh = u(ks[1], (4 * H, H), lstm_b)
    b_ih = u(ks[2], (4 * H,), lstm_b)
    b_hh = u(ks[3], (4 * H,), lstm_b)

    lin_b = 1.0 / (H ** 0.5)
    sigma_w = u(ks[4], (1, H), lin_b); sigma_b = u(ks[5], (1,), lin_b)
    peak_w = u(ks[6], (1, H), lin_b); peak_b = u(ks[7], (1,), lin_b)
    stop_w = u(ks[8], (1, H), lin_b); stop_b = u(ks[9], (1,), lin_b)

    wih_t = jnp.transpose(w_ih)                               # (I, 4H)
    whh_t = jnp.transpose(w_hh)                               # (H, 4H)
    bias = (b_ih + b_hh).reshape(1, 4 * H)                    # (1, 4H)
    heads_w = jnp.concatenate([sigma_w, peak_w, stop_w], 0).T  # (H, 3)
    heads_b = jnp.concatenate([sigma_b, peak_b, stop_b]).reshape(1, 3)
    return (wih_t, whh_t, bias, heads_w, heads_b)


def reference_forward(x, params):
    """Pure-JAX reference of the PyTorch forward (for validation)."""
    if x.ndim == 2:
        x = x[..., None]
    wih_t, whh_t, bias, heads_w, heads_b = params
    B, T, I = x.shape
    H = whh_t.shape[0]

    def step(carry, x_t):
        h, c = carry
        gates = x_t @ wih_t + h @ whh_t + bias
        i_g = jax.nn.sigmoid(gates[:, 0 * H:1 * H])
        f_g = jax.nn.sigmoid(gates[:, 1 * H:2 * H])
        g_g = jnp.tanh(gates[:, 2 * H:3 * H])
        o_g = jax.nn.sigmoid(gates[:, 3 * H:4 * H])
        c = f_g * c + i_g * g_g
        h = o_g * jnp.tanh(c)
        return (h, c), None

    h0 = jnp.zeros((B, H), jnp.float32)
    c0 = jnp.zeros((B, H), jnp.float32)
    (h, _), _ = lax.scan(step, (h0, c0), jnp.transpose(x, (1, 0, 2)))

    heads = h @ heads_w + heads_b
    return heads[:, 0], heads[:, 1], jax.nn.sigmoid(heads[:, 2])


if __name__ == "__main__":
    key = jax.random.PRNGKey(0)
    k_param, k_x = jax.random.split(key)

    # B = 8 fills an f32 sublane; the recurrence latency is ~flat in B, so
    # batching is nearly free throughput.  x is the module's natural 2-D
    # (batch, seq) input (input_dim = 1).
    B, T = 8, 8
    params = init_params(k_param, input_dim=INPUT_DIM, hidden_dim=HIDDEN)
    x = jax.random.normal(k_x, (B, T), jnp.float32)

    sigma, peak, stop_prob = gaussian_param_and_stop_forward(x, params)
    sigma, peak, stop_prob = jax.block_until_ready((sigma, peak, stop_prob))

    r_sigma, r_peak, r_stop = jax.block_until_ready(reference_forward(x, params))
    assert sigma.shape == (B,) and peak.shape == (B,) and stop_prob.shape == (B,)
    for got, ref in ((sigma, r_sigma), (peak, r_peak), (stop_prob, r_stop)):
        assert jnp.allclose(got, ref, atol=1e-5, rtol=1e-5), (got, ref)

    print("KERNEL_OK")
</pallas_src>

<mosaic_0001>
module attributes {stable_mosaic.version = 11 : i64} {
  func.func @_lstm_heads_kernel(%arg0: i32, %arg1: memref<8x8xf32, #tpu.memory_space<vmem>>, %arg2: memref<1x128xf32, #tpu.memory_space<vmem>>, %arg3: memref<32x128xf32, #tpu.memory_space<vmem>>, %arg4: memref<1x128xf32, #tpu.memory_space<vmem>>, %arg5: memref<32x3xf32, #tpu.memory_space<vmem>>, %arg6: memref<1x3xf32, #tpu.memory_space<vmem>>, %arg7: memref<8x3xf32, #tpu.memory_space<vmem>>) attributes {dimension_semantics = [#tpu.dimension_semantics<parallel>], iteration_bounds = array<i64: 1>, scalar_prefetch = 0 : i64, scratch_operands = 0 : i64, tpu.core_type = #tpu.core_type<tc>, window_params = [{transform_indices = @transform_0, window_bounds = array<i64: 8, 8>}, {pipeline_mode = #tpu.pipeline_mode<synchronous>, transform_indices = @transform_1, window_bounds = array<i64: 1, 128>}, {pipeline_mode = #tpu.pipeline_mode<synchronous>, transform_indices = @transform_2, window_bounds = array<i64: 32, 128>}, {pipeline_mode = #tpu.pipeline_mode<synchronous>, transform_indices = @transform_3, window_bounds = array<i64: 1, 128>}, {pipeline_mode = #tpu.pipeline_mode<synchronous>, transform_indices = @transform_4, window_bounds = array<i64: 32, 3>}, {pipeline_mode = #tpu.pipeline_mode<synchronous>, transform_indices = @transform_5, window_bounds = array<i64: 1, 3>}, {transform_indices = @transform_6, window_bounds = array<i64: 8, 3>}]} {
    %c0 = arith.constant 0 : index
    %c0_0 = arith.constant 0 : index
    %0 = vector.load %arg1[%c0, %c0_0] : memref<8x8xf32, #tpu.memory_space<vmem>>, vector<8x8xf32>
    %c0_1 = arith.constant 0 : index
    %c0_2 = arith.constant 0 : index
    %1 = vector.load %arg2[%c0_1, %c0_2] : memref<1x128xf32, #tpu.memory_space<vmem>>, vector<1x128xf32>
    %c0_3 = arith.constant 0 : index
    %c0_4 = arith.constant 0 : index
    %2 = vector.load %arg4[%c0_3, %c0_4] : memref<1x128xf32, #tpu.memory_space<vmem>>, vector<1x128xf32>
    %c0_5 = arith.constant 0 : index
    %c0_6 = arith.constant 0 : index
    %3 = vector.load %arg3[%c0_5, %c0_6] : memref<32x128xf32, #tpu.memory_space<vmem>>, vector<32x128xf32>
    %4 = vector.extract_strided_slice %0 {offsets = [0, 0], sizes = [8, 1], strides = [1, 1]} : vector<8x8xf32> to vector<8x1xf32>
    %5 = vector.broadcast %4 : vector<8x1xf32> to vector<8x128xf32>
    %6 = vector.broadcast %1 : vector<1x128xf32> to vector<8x128xf32>
    %7 = arith.mulf %5, %6 : vector<8x128xf32>
    %8 = vector.broadcast %2 : vector<1x128xf32> to vector<8x128xf32>
    %9 = arith.addf %7, %8 : vector<8x128xf32>
    %10 = vector.extract_strided_slice %0 {offsets = [0, 1], sizes = [8, 1], strides = [1, 1]} : vector<8x8xf32> to vector<8x1xf32>
    %11 = vector.broadcast %10 : vector<8x1xf32> to vector<8x128xf32>
    %12 = vector.broadcast %1 : vector<1x128xf32> to vector<8x128xf32>
    %13 = arith.mulf %11, %12 : vector<8x128xf32>
    %14 = vector.broadcast %2 : vector<1x128xf32> to vector<8x128xf32>
    %15 = arith.addf %13, %14 : vector<8x128xf32>
    %16 = vector.extract_strided_slice %0 {offsets = [0, 2], sizes = [8, 1], strides = [1, 1]} : vector<8x8xf32> to vector<8x1xf32>
    %17 = vector.broadcast %16 : vector<8x1xf32> to vector<8x128xf32>
    %18 = vector.broadcast %1 : vector<1x128xf32> to vector<8x128xf32>
    %19 = arith.mulf %17, %18 : vector<8x128xf32>
    %20 = vector.broadcast %2 : vector<1x128xf32> to vector<8x128xf32>
    %21 = arith.addf %19, %20 : vector<8x128xf32>
    %22 = vector.extract_strided_slice %0 {offsets = [0, 3], sizes = [8, 1], strides = [1, 1]} : vector<8x8xf32> to vector<8x1xf32>
    %23 = vector.broadcast %22 : vector<8x1xf32> to vector<8x128xf32>
    %24 = vector.broadcast %1 : vector<1x128xf32> to vector<8x128xf32>
    %25 = arith.mulf %23, %24 : vector<8x128xf32>
    %26 = vector.broadcast %2 : vector<1x128xf32> to vector<8x128xf32>
    %27 = arith.addf %25, %26 : vector<8x128xf32>
    %28 = vector.extract_strided_slice %0 {offsets = [0, 4], sizes = [8, 1], strides = [1, 1]} : vector<8x8xf32> to vector<8x1xf32>
    %29 = vector.broadcast %28 : vector<8x1xf32> to vector<8x128xf32>
    %30 = vector.broadcast %1 : vector<1x128xf32> to vector<8x128xf32>
    %31 = arith.mulf %29, %30 : vector<8x128xf32>
    %32 = vector.broadcast %2 : vector<1x128xf32> to vector<8x128xf32>
    %33 = arith.addf %31, %32 : vector<8x128xf32>
    %34 = vector.extract_strided_slice %0 {offsets = [0, 5], sizes = [8, 1], strides = [1, 1]} : vector<8x8xf32> to vector<8x1xf32>
    %35 = vector.broadcast %34 : vector<8x1xf32> to vector<8x128xf32>
    %36 = vector.broadcast %1 : vector<1x128xf32> to vector<8x128xf32>
    %37 = arith.mulf %35, %36 : vector<8x128xf32>
    %38 = vector.broadcast %2 : vector<1x128xf32> to vector<8x128xf32>
    %39 = arith.addf %37, %38 : vector<8x128xf32>
    %40 = vector.extract_strided_slice %0 {offsets = [0, 6], sizes = [8, 1], strides = [1, 1]} : vector<8x8xf32> to vector<8x1xf32>
    %41 = vector.broadcast %40 : vector<8x1xf32> to vector<8x128xf32>
    %42 = vector.broadcast %1 : vector<1x128xf32> to vector<8x128xf32>
    %43 = arith.mulf %41, %42 : vector<8x128xf32>
    %44 = vector.broadcast %2 : vector<1x128xf32> to vector<8x128xf32>
    %45 = arith.addf %43, %44 : vector<8x128xf32>
    %46 = vector.extract_strided_slice %0 {offsets = [0, 7], sizes = [8, 1], strides = [1, 1]} : vector<8x8xf32> to vector<8x1xf32>
    %47 = vector.broadcast %46 : vector<8x1xf32> to vector<8x128xf32>
    %48 = vector.broadcast %1 : vector<1x128xf32> to vector<8x128xf32>
    %49 = arith.mulf %47, %48 : vector<8x128xf32>
    %50 = vector.broadcast %2 : vector<1x128xf32> to vector<8x128xf32>
    %51 = arith.addf %49, %50 : vector<8x128xf32>
    %cst = arith.constant 0.000000e+00 : f32
    %52 = vector.broadcast %cst : f32 to vector<8x32xf32>
    %cst_7 = arith.constant 0.000000e+00 : f32
    %53 = vector.broadcast %cst_7 : f32 to vector<8x32xf32>
    %cst_8 = arith.constant dense<0.000000e+00> : vector<8x128xf32>
    %54 = tpu.matmul %52, %3, %cst_8 {dimension_numbers = #tpu.dot_dimension_numbers<[1], [0], [0], [1], [0, 0, 1, 1], [], []>} : vector<8x32xf32>, vector<32x128xf32>, vector<8x128xf32> -> vector<8x128xf32>
    %55 = arith.addf %9, %54 : vector<8x128xf32>
    %56 = arith.negf %55 : vector<8x128xf32>
    %57 = math.exp %56 : vector<8x128xf32>
    %cst_9 = arith.constant 1.000000e+00 : f32
    %58 = vector.broadcast %cst_9 : f32 to vector<8x128xf32>
    %59 = arith.addf %58, %57 : vector<8x128xf32>
    %60 = arith.divf %58, %59 : vector<8x128xf32>
    %61 = vector.extract_strided_slice %60 {offsets = [0, 0], sizes = [8, 32], strides = [1, 1]} : vector<8x128xf32> to vector<8x32xf32>
    %62 = vector.extract_strided_slice %60 {offsets = [0, 32], sizes = [8, 32], strides = [1, 1]} : vector<8x128xf32> to vector<8x32xf32>
    %63 = vector.extract_strided_slice %60 {offsets = [0, 96], sizes = [8, 32], strides = [1, 1]} : vector<8x128xf32> to vector<8x32xf32>
    %64 = vector.extract_strided_slice %55 {offsets = [0, 64], sizes = [8, 32], strides = [1, 1]} : vector<8x128xf32> to vector<8x32xf32>
    %65 = math.tanh %64 : vector<8x32xf32>
    %66 = arith.mulf %62, %53 : vector<8x32xf32>
    %67 = arith.mulf %61, %65 : vector<8x32xf32>
    %68 = arith.addf %66, %67 : vector<8x32xf32>
    %69 = math.tanh %68 : vector<8x32xf32>
    %70 = arith.mulf %63, %69 : vector<8x32xf32>
    %cst_10 = arith.constant dense<0.000000e+00> : vector<8x128xf32>
    %71 = tpu.matmul %70, %3, %cst_10 {dimension_numbers = #tpu.dot_dimension_numbers<[1], [0], [0], [1], [0, 0, 1, 1], [], []>} : vector<8x32xf32>, vector<32x128xf32>, vector<8x128xf32> -> vector<8x128xf32>
    %72 = arith.addf %15, %71 : vector<8x128xf32>
    %73 = arith.negf %72 : vector<8x128xf32>
    %74 = math.exp %73 : vector<8x128xf32>
    %cst_11 = arith.constant 1.000000e+00 : f32
    %75 = vector.broadcast %cst_11 : f32 to vector<8x128xf32>
    %76 = arith.addf %75, %74 : vector<8x128xf32>
    %77 = arith.divf %75, %76 : vector<8x128xf32>
    %78 = vector.extract_strided_slice %77 {offsets = [0, 0], sizes = [8, 32], strides = [1, 1]} : vector<8x128xf32> to vector<8x32xf32>
    %79 = vector.extract_strided_slice %77 {offsets = [0, 32], sizes = [8, 32], strides = [1, 1]} : vector<8x128xf32> to vector<8x32xf32>
    %80 = vector.extract_strided_slice %77 {offsets = [0, 96], sizes = [8, 32], strides = [1, 1]} : vector<8x128xf32> to vector<8x32xf32>
    %81 = vector.extract_strided_slice %72 {offsets = [0, 64], sizes = [8, 32], strides = [1, 1]} : vector<8x128xf32> to vector<8x32xf32>
    %82 = math.tanh %81 : vector<8x32xf32>
    %83 = arith.mulf %79, %68 : vector<8x32xf32>
    %84 = arith.mulf %78, %82 : vector<8x32xf32>
    %85 = arith.addf %83, %84 : vector<8x32xf32>
    %86 = math.tanh %85 : vector<8x32xf32>
    %87 = arith.mulf %80, %86 : vector<8x32xf32>
    %cst_12 = arith.constant dense<0.000000e+00> : vector<8x128xf32>
    %88 = tpu.matmul %87, %3, %cst_12 {dimension_numbers = #tpu.dot_dimension_numbers<[1], [0], [0], [1], [0, 0, 1, 1], [], []>} : vector<8x32xf32>, vector<32x128xf32>, vector<8x128xf32> -> vector<8x128xf32>
    %89 = arith.addf %21, %88 : vector<8x128xf32>
    %90 = arith.negf %89 : vector<8x128xf32>
    %91 = math.exp %90 : vector<8x128xf32>
    %cst_13 = arith.constant 1.000000e+00 : f32
    %92 = vector.broadcast %cst_13 : f32 to vector<8x128xf32>
    %93 = arith.addf %92, %91 : vector<8x128xf32>
    %94 = arith.divf %92, %93 : vector<8x128xf32>
    %95 = vector.extract_strided_slice %94 {offsets = [0, 0], sizes = [8, 32], strides = [1, 1]} : vector<8x128xf32> to vector<8x32xf32>
    %96 = vector.extract_strided_slice %94 {offsets = [0, 32], sizes = [8, 32], strides = [1, 1]} : vector<8x128xf32> to vector<8x32xf32>
    %97 = vector.extract_strided_slice %94 {offsets = [0, 96], sizes = [8, 32], strides = [1, 1]} : vector<8x128xf32> to vector<8x32xf32>
    %98 = vector.extract_strided_slice %89 {offsets = [0, 64], sizes = [8, 32], strides = [1, 1]} : vector<8x128xf32> to vector<8x32xf32>
    %99 = math.tanh %98 : vector<8x32xf32>
    %100 = arith.mulf %96, %85 : vector<8x32xf32>
    %101 = arith.mulf %95, %99 : vector<8x32xf32>
    %102 = arith.addf %100, %101 : vector<8x32xf32>
    %103 = math.tanh %102 : vector<8x32xf32>
    %104 = arith.mulf %97, %103 : vector<8x32xf32>
    %cst_14 = arith.constant dense<0.000000e+00> : vector<8x128xf32>
    %105 = tpu.matmul %104, %3, %cst_14 {dimension_numbers = #tpu.dot_dimension_numbers<[1], [0], [0], [1], [0, 0, 1, 1], [], []>} : vector<8x32xf32>, vector<32x128xf32>, vector<8x128xf32> -> vector<8x128xf32>
    %106 = arith.addf %27, %105 : vector<8x128xf32>
    %107 = arith.negf %106 : vector<8x128xf32>
    %108 = math.exp %107 : vector<8x128xf32>
    %cst_15 = arith.constant 1.000000e+00 : f32
    %109 = vector.broadcast %cst_15 : f32 to vector<8x128xf32>
    %110 = arith.addf %109, %108 : vector<8x128xf32>
    %111 = arith.divf %109, %110 : vector<8x128xf32>
    %112 = vector.extract_strided_slice %111 {offsets = [0, 0], sizes = [8, 32], strides = [1, 1]} : vector<8x128xf32> to vector<8x32xf32>
    %113 = vector.extract_strided_slice %111 {offsets = [0, 32], sizes = [8, 32], strides = [1, 1]} : vector<8x128xf32> to vector<8x32xf32>
    %114 = vector.extract_strided_slice %111 {offsets = [0, 96], sizes = [8, 32], strides = [1, 1]} : vector<8x128xf32> to vector<8x32xf32>
    %115 = vector.extract_strided_slice %106 {offsets = [0, 64], sizes = [8, 32], strides = [1, 1]} : vector<8x128xf32> to vector<8x32xf32>
    %116 = math.tanh %115 : vector<8x32xf32>
    %117 = arith.mulf %113, %102 : vector<8x32xf32>
    %118 = arith.mulf %112, %116 : vector<8x32xf32>
    %119 = arith.addf %117, %118 : vector<8x32xf32>
    %120 = math.tanh %119 : vector<8x32xf32>
    %121 = arith.mulf %114, %120 : vector<8x32xf32>
    %cst_16 = arith.constant dense<0.000000e+00> : vector<8x128xf32>
    %122 = tpu.matmul %121, %3, %cst_16 {dimension_numbers = #tpu.dot_dimension_numbers<[1], [0], [0], [1], [0, 0, 1, 1], [], []>} : vector<8x32xf32>, vector<32x128xf32>, vector<8x128xf32> -> vector<8x128xf32>
    %123 = arith.addf %33, %122 : vector<8x128xf32>
    %124 = arith.negf %123 : vector<8x128xf32>
    %125 = math.exp %124 : vector<8x128xf32>
    %cst_17 = arith.constant 1.000000e+00 : f32
    %126 = vector.broadcast %cst_17 : f32 to vector<8x128xf32>
    %127 = arith.addf %126, %125 : vector<8x128xf32>
    %128 = arith.divf %126, %127 : vector<8x128xf32>
    %129 = vector.extract_strided_slice %128 {offsets = [0, 0], sizes = [8, 32], strides = [1, 1]} : vector<8x128xf32> to vector<8x32xf32>
    %130 = vector.extract_strided_slice %128 {offsets = [0, 32], sizes = [8, 32], strides = [1, 1]} : vector<8x128xf32> to vector<8x32xf32>
    %131 = vector.extract_strided_slice %128 {offsets = [0, 96], sizes = [8, 32], strides = [1, 1]} : vector<8x128xf32> to vector<8x32xf32>
    %132 = vector.extract_strided_slice %123 {offsets = [0, 64], sizes = [8, 32], strides = [1, 1]} : vector<8x128xf32> to vector<8x32xf32>
    %133 = math.tanh %132 : vector<8x32xf32>
    %134 = arith.mulf %130, %119 : vector<8x32xf32>
    %135 = arith.mulf %129, %133 : vector<8x32xf32>
    %136 = arith.addf %134, %135 : vector<8x32xf32>
    %137 = math.tanh %136 : vector<8x32xf32>
    %138 = arith.mulf %131, %137 : vector<8x32xf32>
    %cst_18 = arith.constant dense<0.000000e+00> : vector<8x128xf32>
    %139 = tpu.matmul %138, %3, %cst_18 {dimension_numbers = #tpu.dot_dimension_numbers<[1], [0], [0], [1], [0, 0, 1, 1], [], []>} : vector<8x32xf32>, vector<32x128xf32>, vector<8x128xf32> -> vector<8x128xf32>
    %140 = arith.addf %39, %139 : vector<8x128xf32>
    %141 = arith.negf %140 : vector<8x128xf32>
    %142 = math.exp %141 : vector<8x128xf32>
    %cst_19 = arith.constant 1.000000e+00 : f32
    %143 = vector.broadcast %cst_19 : f32 to vector<8x128xf32>
    %144 = arith.addf %143, %142 : vector<8x128xf32>
    %145 = arith.divf %143, %144 : vector<8x128xf32>
    %146 = vector.extract_strided_slice %145 {offsets = [0, 0], sizes = [8, 32], strides = [1, 1]} : vector<8x128xf32> to vector<8x32xf32>
    %147 = vector.extract_strided_slice %145 {offsets = [0, 32], sizes = [8, 32], strides = [1, 1]} : vector<8x128xf32> to vector<8x32xf32>
    %148 = vector.extract_strided_slice %145 {offsets = [0, 96], sizes = [8, 32], strides = [1, 1]} : vector<8x128xf32> to vector<8x32xf32>
    %149 = vector.extract_strided_slice %140 {offsets = [0, 64], sizes = [8, 32], strides = [1, 1]} : vector<8x128xf32> to vector<8x32xf32>
    %150 = math.tanh %149 : vector<8x32xf32>
    %151 = arith.mulf %147, %136 : vector<8x32xf32>
    %152 = arith.mulf %146, %150 : vector<8x32xf32>
    %153 = arith.addf %151, %152 : vector<8x32xf32>
    %154 = math.tanh %153 : vector<8x32xf32>
    %155 = arith.mulf %148, %154 : vector<8x32xf32>
    %cst_20 = arith.constant dense<0.000000e+00> : vector<8x128xf32>
    %156 = tpu.matmul %155, %3, %cst_20 {dimension_numbers = #tpu.dot_dimension_numbers<[1], [0], [0], [1], [0, 0, 1, 1], [], []>} : vector<8x32xf32>, vector<32x128xf32>, vector<8x128xf32> -> vector<8x128xf32>
    %157 = arith.addf %45, %156 : vector<8x128xf32>
    %158 = arith.negf %157 : vector<8x128xf32>
    %159 = math.exp %158 : vector<8x128xf32>
    %cst_21 = arith.constant 1.000000e+00 : f32
    %160 = vector.broadcast %cst_21 : f32 to vector<8x128xf32>
    %161 = arith.addf %160, %159 : vector<8x128xf32>
    %162 = arith.divf %160, %161 : vector<8x128xf32>
    %163 = vector.extract_strided_slice %162 {offsets = [0, 0], sizes = [8, 32], strides = [1, 1]} : vector<8x128xf32> to vector<8x32xf32>
    %164 = vector.extract_strided_slice %162 {offsets = [0, 32], sizes = [8, 32], strides = [1, 1]} : vector<8x128xf32> to vector<8x32xf32>
    %165 = vector.extract_strided_slice %162 {offsets = [0, 96], sizes = [8, 32], strides = [1, 1]} : vector<8x128xf32> to vector<8x32xf32>
    %166 = vector.extract_strided_slice %157 {offsets = [0, 64], sizes = [8, 32], strides = [1, 1]} : vector<8x128xf32> to vector<8x32xf32>
    %167 = math.tanh %166 : vector<8x32xf32>
    %168 = arith.mulf %164, %153 : vector<8x32xf32>
    %169 = arith.mulf %163, %167 : vector<8x32xf32>
    %170 = arith.addf %168, %169 : vector<8x32xf32>
    %171 = math.tanh %170 : vector<8x32xf32>
    %172 = arith.mulf %165, %171 : vector<8x32xf32>
    %cst_22 = arith.constant dense<0.000000e+00> : vector<8x128xf32>
    %173 = tpu.matmul %172, %3, %cst_22 {dimension_numbers = #tpu.dot_dimension_numbers<[1], [0], [0], [1], [0, 0, 1, 1], [], []>} : vector<8x32xf32>, vector<32x128xf32>, vector<8x128xf32> -> vector<8x128xf32>
    %174 = arith.addf %51, %173 : vector<8x128xf32>
    %175 = arith.negf %174 : vector<8x128xf32>
    %176 = math.exp %175 : vector<8x128xf32>
    %cst_23 = arith.constant 1.000000e+00 : f32
    %177 = vector.broadcast %cst_23 : f32 to vector<8x128xf32>
    %178 = arith.addf %177, %176 : vector<8x128xf32>
    %179 = arith.divf %177, %178 : vector<8x128xf32>
    %180 = vector.extract_strided_slice %179 {offsets = [0, 0], sizes = [8, 32], strides = [1, 1]} : vector<8x128xf32> to vector<8x32xf32>
    %181 = vector.extract_strided_slice %179 {offsets = [0, 32], sizes = [8, 32], strides = [1, 1]} : vector<8x128xf32> to vector<8x32xf32>
    %182 = vector.extract_strided_slice %179 {offsets = [0, 96], sizes = [8, 32], strides = [1, 1]} : vector<8x128xf32> to vector<8x32xf32>
    %183 = vector.extract_strided_slice %174 {offsets = [0, 64], sizes = [8, 32], strides = [1, 1]} : vector<8x128xf32> to vector<8x32xf32>
    %184 = math.tanh %183 : vector<8x32xf32>
    %185 = arith.mulf %181, %170 : vector<8x32xf32>
    %186 = arith.mulf %180, %184 : vector<8x32xf32>
    %187 = arith.addf %185, %186 : vector<8x32xf32>
    %188 = math.tanh %187 : vector<8x32xf32>
    %189 = arith.mulf %182, %188 : vector<8x32xf32>
    %c0_24 = arith.constant 0 : index
    %c0_25 = arith.constant 0 : index
    %190 = vector.load %arg5[%c0_24, %c0_25] : memref<32x3xf32, #tpu.memory_space<vmem>>, vector<32x3xf32>
    %cst_26 = arith.constant dense<0.000000e+00> : vector<8x3xf32>
    %191 = tpu.matmul %189, %190, %cst_26 {dimension_numbers = #tpu.dot_dimension_numbers<[1], [0], [0], [1], [0, 0, 1, 1], [], []>} : vector<8x32xf32>, vector<32x3xf32>, vector<8x3xf32> -> vector<8x3xf32>
    %c0_27 = arith.constant 0 : index
    %c0_28 = arith.constant 0 : index
    %192 = vector.load %arg6[%c0_27, %c0_28] : memref<1x3xf32, #tpu.memory_space<vmem>>, vector<1x3xf32>
    %193 = vector.broadcast %192 : vector<1x3xf32> to vector<8x3xf32>
    %194 = arith.addf %191, %193 : vector<8x3xf32>
    %195 = tpu.iota {dimensions = array<i32: 1>} : vector<8x3xi32>
    %c2_i32 = arith.constant 2 : i32
    %196 = vector.broadcast %c2_i32 : i32 to vector<8x3xi32>
    %197 = arith.cmpi eq, %195, %196 : vector<8x3xi32>
    %198 = arith.negf %194 : vector<8x3xf32>
    %199 = math.exp %198 : vector<8x3xf32>
    %cst_29 = arith.constant 1.000000e+00 : f32
    %200 = vector.broadcast %cst_29 : f32 to vector<8x3xf32>
    %201 = arith.addf %200, %199 : vector<8x3xf32>
    %202 = arith.divf %200, %201 : vector<8x3xf32>
    %203 = arith.select %197, %202, %194 : vector<8x3xi1>, vector<8x3xf32>
    %c0_30 = arith.constant 0 : index
    %c0_31 = arith.constant 0 : index
    %204 = vector.load %arg7[%c0_30, %c0_31] : memref<8x3xf32, #tpu.memory_space<vmem>>, vector<8x3xf32>
    tpu.vector_store %arg7[%c0_30, %c0_31], %203 {strides = array<i32>} : memref<8x3xf32, #tpu.memory_space<vmem>>, vector<8x3xf32>,
    return
  }
  func.func @transform_0(%arg0: i32) -> (i32, i32) {
    %c0_i32 = arith.constant 0 : i32
    %c0_i32_0 = arith.constant 0 : i32
    return %arg0, %c0_i32 : i32, i32
  }
  func.func @transform_1(%arg0: i32) -> (i32, i32) {
    %c0_i32 = arith.constant 0 : i32
    %c0_i32_0 = arith.constant 0 : i32
    %c0_i32_1 = arith.constant 0 : i32
    return %c0_i32, %c0_i32_0 : i32, i32
  }
  func.func @transform_2(%arg0: i32) -> (i32, i32) {
    %c0_i32 = arith.constant 0 : i32
    %c0_i32_0 = arith.constant 0 : i32
    %c0_i32_1 = arith.constant 0 : i32
    return %c0_i32, %c0_i32_0 : i32, i32
  }
  func.func @transform_3(%arg0: i32) -> (i32, i32) {
    %c0_i32 = arith.constant 0 : i32
    %c0_i32_0 = arith.constant 0 : i32
    %c0_i32_1 = arith.constant 0 : i32
    return %c0_i32, %c0_i32_0 : i32, i32
  }
  func.func @transform_4(%arg0: i32) -> (i32, i32) {
    %c0_i32 = arith.constant 0 : i32
    %c0_i32_0 = arith.constant 0 : i32
    %c0_i32_1 = arith.constant 0 : i32
    return %c0_i32, %c0_i32_0 : i32, i32
  }
  func.func @transform_5(%arg0: i32) -> (i32, i32) {
    %c0_i32 = arith.constant 0 : i32
    %c0_i32_0 = arith.constant 0 : i32
    %c0_i32_1 = arith.constant 0 : i32
    return %c0_i32, %c0_i32_0 : i32, i32
  }
  func.func @transform_6(%arg0: i32) -> (i32, i32) {
    %c0_i32 = arith.constant 0 : i32
    %c0_i32_0 = arith.constant 0 : i32
    return %arg0, %c0_i32 : i32, i32
  }
}

</mosaic_0001>

<llo_original>
// kernel: tpu_custom_call.1
$region0: #{tpu_custom_call.1}
  #allocation0 [shape = 'u32[]', space=smem, size = 0x4, offset = 0x4, fixed_abs, tag = 'smem constant byte address 0x4 - core index']
  #allocation1 [shape = 'u32[144,128]{1,0:T(1,128)}', space=vmem, size = 0x12000, scoped, tag = 'internal scratch']
  %s0 = inlined_call_operand.vmem [shape: f32[8,8], index: 0, kind: input, shape index: {}]
  %s1 = inlined_call_operand.vmem [shape: f32[1,128], index: 1, kind: input, shape index: {}]
  %s2 = inlined_call_operand.vmem [shape: f32[32,128], index: 2, kind: input, shape index: {}]
  %s3 = inlined_call_operand.vmem [shape: f32[1,128], index: 3, kind: input, shape index: {}]
  %s4 = inlined_call_operand.vmem [shape: f32[32,3], index: 4, kind: input, shape index: {}]
  %s5 = inlined_call_operand.vmem [shape: f32[1,3], index: 5, kind: input, shape index: {}]
  %s6 = inlined_call_operand.vmem [shape: f32[8,3], index: 6, kind: output, shape index: {}]
  %s7 = sld [smem:[#allocation0]]
  $region34: #{tpu_custom_call.1} parent=0
    _
  %s9 = ssub.s32 1, %s7
  %s10 = scalar_select 0, %s9, %s7
  // Predicated region
  $region2: #{tpu_custom_call.1} parent=0 // pred_check
    _
  $region3: #{tpu_custom_call.1} parent=0 // pred_check_branch
    %12 = sbr.rel (0) target = $region5
  $region4: #{tpu_custom_call.1} parent=0 // pred_region
    _
  $region5: #{tpu_custom_call.1} parent=0 // pred_fallthru
    _
  // Predicated region
  $region6: #{tpu_custom_call.1} parent=0 // pred_check
    _
  $region7: #{tpu_custom_call.1} parent=0 // pred_check_branch
    %14 = sbr.rel (0) target = $region9
  $region8: #{tpu_custom_call.1} parent=0 // pred_region
    _
  $region9: #{tpu_custom_call.1} parent=0 // pred_fallthru
    _
  // Predicated region
  $region10: #{tpu_custom_call.1} parent=0 // pred_check
    _
  $region11: #{tpu_custom_call.1} parent=0 // pred_check_branch
    %16 = sbr.rel (0) target = $region13
  $region12: #{tpu_custom_call.1} parent=0 // pred_region
    _
  $region13: #{tpu_custom_call.1} parent=0 // pred_fallthru
    _
  // Predicated region
  $region14: #{tpu_custom_call.1} parent=0 // pred_check
    _
  $region15: #{tpu_custom_call.1} parent=0 // pred_check_branch
    %18 = sbr.rel (0) target = $region17
  $region16: #{tpu_custom_call.1} parent=0 // pred_region
    _
  $region17: #{tpu_custom_call.1} parent=0 // pred_fallthru
    _
  // Predicated region
  $region18: #{tpu_custom_call.1} parent=0 // pred_check
    _
  $region19: #{tpu_custom_call.1} parent=0 // pred_check_branch
    %20 = sbr.rel (0) target = $region21
  $region20: #{tpu_custom_call.1} parent=0 // pred_region
    _
  $region21: #{tpu_custom_call.1} parent=0 // pred_fallthru
    _
  // Predicated region
  $region22: #{tpu_custom_call.1} parent=0 // pred_check
    _
  $region23: #{tpu_custom_call.1} parent=0 // pred_check_branch
    %22 = sbr.rel (0) target = $region25
  $region24: #{tpu_custom_call.1} parent=0 // pred_region
    _
  $region25: #{tpu_custom_call.1} parent=0 // pred_fallthru
    _
  %v23 = vld [vmem:[%s0] sm:$0xff]
  %v24 = vld [vmem:[%s1] sm:$0x1]
  %v25 = vld [vmem:[%s3] sm:$0x1]
  %v26 = vld [vmem:[%s2] sm:$0xff]
  %v27 = vld [vmem:[%s2 + $0x8] sm:$0xff]
  %v28 = vld [vmem:[%s2 + $0x10] sm:$0xff]
  %v29 = vld [vmem:[%s2 + $0x18] sm:$0xff]
  %31 = vset.pattern.permute.xlu0 0
  %32 = vperm.xlu0 %31, %v23
  %v33 = vpop.permute.xlu0 %32
  %v36 = vlaneseq
  %v37 = vshrl.u32 %v36, 7
  %v38 = vsub.s32 0, %v37
  %v39 = vrot.slane %v24, %v38
  %v41 = vmul.f32 %v33, %v39
  %v43 = vlaneseq
  %v44 = vshrl.u32 %v43, 7
  %v45 = vsub.s32 0, %v44
  %v46 = vrot.slane %v25, %v45
  %v48 = vadd.f32 %v41, %v46
  %49 = vset.pattern.permute.xlu0 1
  %50 = vperm.xlu0 %49, %v23
  %v51 = vpop.permute.xlu0 %50
  %v53 = vmul.f32 %v51, %v39
  %v54 = vadd.f32 %v53, %v46
  %55 = vset.pattern.permute.xlu0 2
  %56 = vperm.xlu0 %55, %v23
  %v57 = vpop.permute.xlu0 %56
  %v59 = vmul.f32 %v57, %v39
  %v60 = vadd.f32 %v59, %v46
  %61 = vset.pattern.permute.xlu0 3
  %62 = vperm.xlu0 %61, %v23
  %v63 = vpop.permute.xlu0 %62
  %v65 = vmul.f32 %v63, %v39
  %v66 = vadd.f32 %v65, %v46
  %67 = vset.pattern.permute.xlu0 4
  %68 = vperm.xlu0 %67, %v23
  %v69 = vpop.permute.xlu0 %68
  %v71 = vmul.f32 %v69, %v39
  %v72 = vadd.f32 %v71, %v46
  %73 = vset.pattern.permute.xlu0 5
  %74 = vperm.xlu0 %73, %v23
  %v75 = vpop.permute.xlu0 %74
  %v77 = vmul.f32 %v75, %v39
  %v78 = vadd.f32 %v77, %v46
  %79 = vset.pattern.permute.xlu0 6
  %80 = vperm.xlu0 %79, %v23
  %v81 = vpop.permute.xlu0 %80
  %v83 = vmul.f32 %v81, %v39
  %v84 = vadd.f32 %v83, %v46
  %85 = vset.pattern.permute.xlu0 7
  %86 = vperm.xlu0 %85, %v23
  %v87 = vpop.permute.xlu0 %86
  %v89 = vmul.f32 %v87, %v39
  %v90 = vadd.f32 %v89, %v46
  %vm91 = vcmask 261120
  %v93 = vsel %vm91, 0.0, 0
  %95 = vmatprep.subr.mxu0 0.0
  %96 = vmatpush1.msra.mxu0 %v26
  %97 = vmatprep.subr.mxu0 0.0
  %98 = vmatpush1.msra.mxu0 %v27
  %99 = vmatprep.subr.mxu0 0.0
  %100 = vmatpush1.msra.mxu0 %v28
  %101 = vmatprep.subr.mxu0 0.0
  %102 = vmatpush1.msra.mxu0 %v29
  %103 = vmatprep.subr.mxu0 0.0
  %104 = vmatpush1.msra.mxu0 0.0
  %105 = vmatprep.subr.mxu0 0.0
  %106 = vmatpush1.msra.mxu0 0.0
  %107 = vmatprep.subr.mxu0 0.0
  %108 = vmatpush1.msra.mxu0 0.0
  %109 = vmatprep.subr.mxu0 0.0
  %110 = vmatpush1.msra.mxu0 0.0
  %111 = vmatprep.subr.mxu0 0.0
  %112 = vmatpush1.msra.mxu0 0.0
  %113 = vmatprep.subr.mxu0 0.0
  %114 = vmatpush1.msra.mxu0 0.0
  %115 = vmatprep.subr.mxu0 0.0
  %116 = vmatpush1.msra.mxu0 0.0
  %117 = vmatprep.subr.mxu0 0.0
  %118 = vmatpush1.msra.mxu0 0.0
  %119 = vmatprep.subr.mxu0 0.0
  %120 = vmatpush1.msra.mxu0 0.0
  %121 = vmatprep.subr.mxu0 0.0
  %122 = vmatpush1.msra.mxu0 0.0
  %123 = vmatprep.subr.mxu0 0.0
  %124 = vmatpush1.msra.mxu0 0.0
  %125 = vmatprep.subr.mxu0 0.0
  %126 = vmatpush1.msra.mxu0 0.0
  %127 = vmatprep.subr.mxu0 0.0
  %128 = vmatpush1.msra.mxu0 0.0
  %129 = vmatprep.subr.mxu0 0.0
  %130 = vmatpush1.msra.mxu0 0.0
  %131 = vmatprep.subr.mxu0 0.0
  %132 = vmatpush1.msra.mxu0 0.0
  %133 = vmatprep.subr.mxu0 0.0
  %134 = vmatpush1.msra.mxu0 0.0
  %135 = vmatprep.subr.mxu0 0.0
  %136 = vmatpush1.msra.mxu0 0.0
  %137 = vmatprep.subr.mxu0 0.0
  %138 = vmatpush1.msra.mxu0 0.0
  %139 = vmatprep.subr.mxu0 0.0
  %140 = vmatpush1.msra.mxu0 0.0
  %141 = vmatprep.subr.mxu0 0.0
  %142 = vmatpush1.msra.mxu0 0.0
  %143 = vmatprep.subr.mxu0 0.0
  %144 = vmatpush1.msra.mxu0 0.0
  %145 = vmatprep.subr.mxu0 0.0
  %146 = vmatpush1.msra.mxu0 0.0
  %147 = vmatprep.subr.mxu0 0.0
  %148 = vmatpush1.msra.mxu0 0.0
  %149 = vmatprep.subr.mxu0 0.0
  %150 = vmatpush1.msra.mxu0 0.0
  %151 = vmatprep.subr.mxu0 0.0
  %152 = vmatpush1.msra.mxu0 0.0
  %153 = vmatprep.subr.mxu0 0.0
  %154 = vmatpush1.msra.mxu0 0.0
  %155 = vmatprep.subr.mxu0 0.0
  %156 = vmatpush1.msra.mxu0 0.0
  %157 = vmatprep.subr.mxu0 0.0
  %158 = vmatpush1.msra.mxu0 0.0
  %159 = vmatprep.mubr.f32.mxu0 0.0
  %160 = vmatmul.mubr.f32.gmra.mrb[0].mxu0 %v93
  %v161 = vpop.f32.mrb[0].mxu0
  %v162 = vadd.f32 0.0, %v161
  %v163 = vpop.f32.mrb[0].mxu0
  %164 = vdwg.mxu0
  %v165 = vadd.f32 %v48, %v162
  %v166 = vxor.u32 %v165, 2147483648
  %v167 = vmul.f32 %v166, 1.442695
  %v168 = vpow.pop %v167
  %v169 = vadd.f32 %v168, 1.0
  %v170 = vrcp.pop %v169
  %v171 = vmul.f32 1.0, %v170
  %v172 = vtanh.pop %v165
  %v173 = vmul.f32 %v171, 0.0
  %175 = vrot.lane.b32.xlu0 %v172, 64
  %v176 = vpop.permute.xlu0 %175
  %v178 = vmul.f32 %v171, %v176
  %180 = vrot.lane.b32.xlu0 %v178, 32
  %v181 = vpop.permute.xlu0 %180
  %v183 = vadd.f32 %v173, %v181
  %v184 = vtanh.pop %v183
  %186 = vrot.lane.b32.xlu0 %v184, 64
  %v187 = vpop.permute.xlu0 %186
  %v189 = vmul.f32 %v171, %v187
  %191 = vrot.lane.b32.xlu0 %v189, 32
  %v192 = vpop.permute.xlu0 %191
  %v193 = vsel %vm91, %v192, 0
  %195 = vmatprep.subr.mxu0 0.0
  %196 = vmatpush1.msra.mxu0 %v26
  %197 = vmatprep.subr.mxu0 0.0
  %198 = vmatpush1.msra.mxu0 %v27
  %199 = vmatprep.subr.mxu0 0.0
  %200 = vmatpush1.msra.mxu0 %v28
  %201 = vmatprep.subr.mxu0 0.0
  %202 = vmatpush1.msra.mxu0 %v29
  %203 = vmatprep.subr.mxu0 0.0
  %204 = vmatpush1.msra.mxu0 0.0
  %205 = vmatprep.subr.mxu0 0.0
  %206 = vmatpush1.msra.mxu0 0.0
  %207 = vmatprep.subr.mxu0 0.0
  %208 = vmatpush1.msra.mxu0 0.0
  %209 = vmatprep.subr.mxu0 0.0
  %210 = vmatpush1.msra.mxu0 0.0
  %211 = vmatprep.subr.mxu0 0.0
  %212 = vmatpush1.msra.mxu0 0.0
  %213 = vmatprep.subr.mxu0 0.0
  %214 = vmatpush1.msra.mxu0 0.0
  %215 = vmatprep.subr.mxu0 0.0
  %216 = vmatpush1.msra.mxu0 0.0
  %217 = vmatprep.subr.mxu0 0.0
  %218 = vmatpush1.msra.mxu0 0.0
  %219 = vmatprep.subr.mxu0 0.0
  %220 = vmatpush1.msra.mxu0 0.0
  %221 = vmatprep.subr.mxu0 0.0
  %222 = vmatpush1.msra.mxu0 0.0
  %223 = vmatprep.subr.mxu0 0.0
  %224 = vmatpush1.msra.mxu0 0.0
  %225 = vmatprep.subr.mxu0 0.0
  %226 = vmatpush1.msra.mxu0 0.0
  %227 = vmatprep.subr.mxu0 0.0
  %228 = vmatpush1.msra.mxu0 0.0
  %229 = vmatprep.subr.mxu0 0.0
  %230 = vmatpush1.msra.mxu0 0.0
  %231 = vmatprep.subr.mxu0 0.0
  %232 = vmatpush1.msra.mxu0 0.0
  %233 = vmatprep.subr.mxu0 0.0
  %234 = vmatpush1.msra.mxu0 0.0
  %235 = vmatprep.subr.mxu0 0.0
  %236 = vmatpush1.msra.mxu0 0.0
  %237 = vmatprep.subr.mxu0 0.0
  %238 = vmatpush1.msra.mxu0 0.0
  %239 = vmatprep.subr.mxu0 0.0
  %240 = vmatpush1.msra.mxu0 0.0
  %241 = vmatprep.subr.mxu0 0.0
  %242 = vmatpush1.msra.mxu0 0.0
  %243 = vmatprep.subr.mxu0 0.0
  %244 = vmatpush1.msra.mxu0 0.0
  %245 = vmatprep.subr.mxu0 0.0
  %246 = vmatpush1.msra.mxu0 0.0
  %247 = vmatprep.subr.mxu0 0.0
  %248 = vmatpush1.msra.mxu0 0.0
  %249 = vmatprep.subr.mxu0 0.0
  %250 = vmatpush1.msra.mxu0 0.0
  %251 = vmatprep.subr.mxu0 0.0
  %252 = vmatpush1.msra.mxu0 0.0
  %253 = vmatprep.subr.mxu0 0.0
  %254 = vmatpush1.msra.mxu0 0.0
  %255 = vmatprep.subr.mxu0 0.0
  %256 = vmatpush1.msra.mxu0 0.0
  %257 = vmatprep.subr.mxu0 0.0
  %258 = vmatpush1.msra.mxu0 0.0
  %259 = vmatprep.mubr.f32.mxu0 0.0
  %260 = vmatmul.mubr.f32.gmra.mrb[0].mxu0 %v193
  %v261 = vpop.f32.mrb[0].mxu0
  %v262 = vadd.f32 0.0, %v261
  %v263 = vpop.f32.mrb[0].mxu0
  %264 = vdwg.mxu0
  %v265 = vadd.f32 %v54, %v262
  %v266 = vxor.u32 %v265, 2147483648
  %v267 = vmul.f32 %v266, 1.442695
  %v268 = vpow.pop %v267
  %v269 = vadd.f32 %v268, 1.0
  %v270 = vrcp.pop %v269
  %v271 = vmul.f32 1.0, %v270
  %v272 = vtanh.pop %v265
  %v273 = vmul.f32 %v271, %v183
  %275 = vrot.lane.b32.xlu0 %v272, 64
  %v276 = vpop.permute.xlu0 %275
  %v278 = vmul.f32 %v271, %v276
  %280 = vrot.lane.b32.xlu0 %v278, 32
  %v281 = vpop.permute.xlu0 %280
  %v283 = vadd.f32 %v273, %v281
  %v284 = vtanh.pop %v283
  %286 = vrot.lane.b32.xlu0 %v284, 64
  %v287 = vpop.permute.xlu0 %286
  %v289 = vmul.f32 %v271, %v287
  %291 = vrot.lane.b32.xlu0 %v289, 32
  %v292 = vpop.permute.xlu0 %291
  %v293 = vsel %vm91, %v292, 0
  %295 = vmatprep.subr.mxu0 0.0
  %296 = vmatpush1.msra.mxu0 %v26
  %297 = vmatprep.subr.mxu0 0.0
  %298 = vmatpush1.msra.mxu0 %v27
  %299 = vmatprep.subr.mxu0 0.0
  %300 = vmatpush1.msra.mxu0 %v28
  %301 = vmatprep.subr.mxu0 0.0
  %302 = vmatpush1.msra.mxu0 %v29
  %303 = vmatprep.subr.mxu0 0.0
  %304 = vmatpush1.msra.mxu0 0.0
  %305 = vmatprep.subr.mxu0 0.0
  %306 = vmatpush1.msra.mxu0 0.0
  %307 = vmatprep.subr.mxu0 0.0
  %308 = vmatpush1.msra.mxu0 0.0
  %309 = vmatprep.subr.mxu0 0.0
  %310 = vmatpush1.msra.mxu0 0.0
  %311 = vmatprep.subr.mxu0 0.0
  %312 = vmatpush1.msra.mxu0 0.0
  %313 = vmatprep.subr.mxu0 0.0
  %314 = vmatpush1.msra.mxu0 0.0
  %315 = vmatprep.subr.mxu0 0.0
  %316 = vmatpush1.msra.mxu0 0.0
  %317 = vmatprep.subr.mxu0 0.0
  %318 = vmatpush1.msra.mxu0 0.0
  %319 = vmatprep.subr.mxu0 0.0
  %320 = vmatpush1.msra.mxu0 0.0
  %321 = vmatprep.subr.mxu0 0.0
  %322 = vmatpush1.msra.mxu0 0.0
  %323 = vmatprep.subr.mxu0 0.0
  %324 = vmatpush1.msra.mxu0 0.0
  %325 = vmatprep.subr.mxu0 0.0
  %326 = vmatpush1.msra.mxu0 0.0
  %327 = vmatprep.subr.mxu0 0.0
  %328 = vmatpush1.msra.mxu0 0.0
  %329 = vmatprep.subr.mxu0 0.0
  %330 = vmatpush1.msra.mxu0 0.0
  %331 = vmatprep.subr.mxu0 0.0
  %332 = vmatpush1.msra.mxu0 0.0
  %333 = vmatprep.subr.mxu0 0.0
  %334 = vmatpush1.msra.mxu0 0.0
  %335 = vmatprep.subr.mxu0 0.0
  %336 = vmatpush1.msra.mxu0 0.0
  %337 = vmatprep.subr.mxu0 0.0
  %338 = vmatpush1.msra.mxu0 0.0
  %339 = vmatprep.subr.mxu0 0.0
  %340 = vmatpush1.msra.mxu0 0.0
  %341 = vmatprep.subr.mxu0 0.0
  %342 = vmatpush1.msra.mxu0 0.0
  %343 = vmatprep.subr.mxu0 0.0
  %344 = vmatpush1.msra.mxu0 0.0
  %345 = vmatprep.subr.mxu0 0.0
  %346 = vmatpush1.msra.mxu0 0.0
  %347 = vmatprep.subr.mxu0 0.0
  %348 = vmatpush1.msra.mxu0 0.0
  %349 = vmatprep.subr.mxu0 0.0
  %350 = vmatpush1.msra.mxu0 0.0
  %351 = vmatprep.subr.mxu0 0.0
  %352 = vmatpush1.msra.mxu0 0.0
  %353 = vmatprep.subr.mxu0 0.0
  %354 = vmatpush1.msra.mxu0 0.0
  %355 = vmatprep.subr.mxu0 0.0
  %356 = vmatpush1.msra.mxu0 0.0
  %357 = vmatprep.subr.mxu0 0.0
  %358 = vmatpush1.msra.mxu0 0.0
  %359 = vmatprep.mubr.f32.mxu0 0.0
  %360 = vmatmul.mubr.f32.gmra.mrb[0].mxu0 %v293
  %v361 = vpop.f32.mrb[0].mxu0
  %v362 = vadd.f32 0.0, %v361
  %v363 = vpop.f32.mrb[0].mxu0
  %364 = vdwg.mxu0
  %v365 = vadd.f32 %v60, %v362
  %v366 = vxor.u32 %v365, 2147483648
  %v367 = vmul.f32 %v366, 1.442695
  %v368 = vpow.pop %v367
  %v369 = vadd.f32 %v368, 1.0
  %v370 = vrcp.pop %v369
  %v371 = vmul.f32 1.0, %v370
  %v372 = vtanh.pop %v365
  %v373 = vmul.f32 %v371, %v283
  %375 = vrot.lane.b32.xlu0 %v372, 64
  %v376 = vpop.permute.xlu0 %375
  %v378 = vmul.f32 %v371, %v376
  %380 = vrot.lane.b32.xlu0 %v378, 32
  %v381 = vpop.permute.xlu0 %380
  %v383 = vadd.f32 %v373, %v381
  %v384 = vtanh.pop %v383
  %386 = vrot.lane.b32.xlu0 %v384, 64
  %v387 = vpop.permute.xlu0 %386
  %v389 = vmul.f32 %v371, %v387
  %391 = vrot.lane.b32.xlu0 %v389, 32
  %v392 = vpop.permute.xlu0 %391
  %v393 = vsel %vm91, %v392, 0
  %395 = vmatprep.subr.mxu0 0.0
  %396 = vmatpush1.msra.mxu0 %v26
  %397 = vmatprep.subr.mxu0 0.0
  %398 = vmatpush1.msra.mxu0 %v27
  %399 = vmatprep.subr.mxu0 0.0
  %400 = vmatpush1.msra.mxu0 %v28
  %401 = vmatprep.subr.mxu0 0.0
  %402 = vmatpush1.msra.mxu0 %v29
  %403 = vmatprep.subr.mxu0 0.0
  %404 = vmatpush1.msra.mxu0 0.0
  %405 = vmatprep.subr.mxu0 0.0
  %406 = vmatpush1.msra.mxu0 0.0
  %407 = vmatprep.subr.mxu0 0.0
  %408 = vmatpush1.msra.mxu0 0.0
  %409 = vmatprep.subr.mxu0 0.0
  %410 = vmatpush1.msra.mxu0 0.0
  %411 = vmatprep.subr.mxu0 0.0
  %412 = vmatpush1.msra.mxu0 0.0
  %413 = vmatprep.subr.mxu0 0.0
  %414 = vmatpush1.msra.mxu0 0.0
  %415 = vmatprep.subr.mxu0 0.0
  %416 = vmatpush1.msra.mxu0 0.0
  %417 = vmatprep.subr.mxu0 0.0
  %418 = vmatpush1.msra.mxu0 0.0
  %419 = vmatprep.subr.mxu0 0.0
  %420 = vmatpush1.msra.mxu0 0.0
  %421 = vmatprep.subr.mxu0 0.0
  %422 = vmatpush1.msra.mxu0 0.0
  %423 = vmatprep.subr.mxu0 0.0
  %424 = vmatpush1.msra.mxu0 0.0
  %425 = vmatprep.subr.mxu0 0.0
  %426 = vmatpush1.msra.mxu0 0.0
  %427 = vmatprep.subr.mxu0 0.0
  %428 = vmatpush1.msra.mxu0 0.0
  %429 = vmatprep.subr.mxu0 0.0
  %430 = vmatpush1.msra.mxu0 0.0
  %431 = vmatprep.subr.mxu0 0.0
  %432 = vmatpush1.msra.mxu0 0.0
  %433 = vmatprep.subr.mxu0 0.0
  %434 = vmatpush1.msra.mxu0 0.0
  %435 = vmatprep.subr.mxu0 0.0
  %436 = vmatpush1.msra.mxu0 0.0
  %437 = vmatprep.subr.mxu0 0.0
  %438 = vmatpush1.msra.mxu0 0.0
  %439 = vmatprep.subr.mxu0 0.0
  %440 = vmatpush1.msra.mxu0 0.0
  %441 = vmatprep.subr.mxu0 0.0
  %442 = vmatpush1.msra.mxu0 0.0
  %443 = vmatprep.subr.mxu0 0.0
  %444 = vmatpush1.msra.mxu0 0.0
  %445 = vmatprep.subr.mxu0 0.0
  %446 = vmatpush1.msra.mxu0 0.0
  %447 = vmatprep.subr.mxu0 0.0
  %448 = vmatpush1.msra.mxu0 0.0
  %449 = vmatprep.subr.mxu0 0.0
  %450 = vmatpush1.msra.mxu0 0.0
  %451 = vmatprep.subr.mxu0 0.0
  %452 = vmatpush1.msra.mxu0 0.0
  %453 = vmatprep.subr.mxu0 0.0
  %454 = vmatpush1.msra.mxu0 0.0
  %455 = vmatprep.subr.mxu0 0.0
  %456 = vmatpush1.msra.mxu0 0.0
  %457 = vmatprep.subr.mxu0 0.0
  %458 = vmatpush1.msra.mxu0 0.0
  %459 = vmatprep.mubr.f32.mxu0 0.0
  %460 = vmatmul.mubr.f32.gmra.mrb[0].mxu0 %v393
  %v461 = vpop.f32.mrb[0].mxu0
  %v462 = vadd.f32 0.0, %v461
  %v463 = vpop.f32.mrb[0].mxu0
  %464 = vdwg.mxu0
  %v465 = vadd.f32 %v66, %v462
  %v466 = vxor.u32 %v465, 2147483648
  %v467 = vmul.f32 %v466, 1.442695
  %v468 = vpow.pop %v467
  %v469 = vadd.f32 %v468, 1.0
  %v470 = vrcp.pop %v469
  %v471 = vmul.f32 1.0, %v470
  %v472 = vtanh.pop %v465
  %v473 = vmul.f32 %v471, %v383
  %475 = vrot.lane.b32.xlu0 %v472, 64
  %v476 = vpop.permute.xlu0 %475
  %v478 = vmul.f32 %v471, %v476
  %480 = vrot.lane.b32.xlu0 %v478, 32
  %v481 = vpop.permute.xlu0 %480
  %v483 = vadd.f32 %v473, %v481
  %v484 = vtanh.pop %v483
  %486 = vrot.lane.b32.xlu0 %v484, 64
  %v487 = vpop.permute.xlu0 %486
  %v489 = vmul.f32 %v471, %v487
  %491 = vrot.lane.b32.xlu0 %v489, 32
  %v492 = vpop.permute.xlu0 %491
  %v493 = vsel %vm91, %v492, 0
  %495 = vmatprep.subr.mxu0 0.0
  %496 = vmatpush1.msra.mxu0 %v26
  %497 = vmatprep.subr.mxu0 0.0
  %498 = vmatpush1.msra.mxu0 %v27
  %499 = vmatprep.subr.mxu0 0.0
  %500 = vmatpush1.msra.mxu0 %v28
  %501 = vmatprep.subr.mxu0 0.0
  %502 = vmatpush1.msra.mxu0 %v29
  %503 = vmatprep.subr.mxu0 0.0
  %504 = vmatpush1.msra.mxu0 0.0
  %505 = vmatprep.subr.mxu0 0.0
  %506 = vmatpush1.msra.mxu0 0.0
  %507 = vmatprep.subr.mxu0 0.0
  %508 = vmatpush1.msra.mxu0 0.0
  %509 = vmatprep.subr.mxu0 0.0
  %510 = vmatpush1.msra.mxu0 0.0
  %511 = vmatprep.subr.mxu0 0.0
  %512 = vmatpush1.msra.mxu0 0.0
  %513 = vmatprep.subr.mxu0 0.0
  %514 = vmatpush1.msra.mxu0 0.0
  %515 = vmatprep.subr.mxu0 0.0
  %516 = vmatpush1.msra.mxu0 0.0
  %517 = vmatprep.subr.mxu0 0.0
  %518 = vmatpush1.msra.mxu0 0.0
  %519 = vmatprep.subr.mxu0 0.0
  %520 = vmatpush1.msra.mxu0 0.0
  %521 = vmatprep.subr.mxu0 0.0
  %522 = vmatpush1.msra.mxu0 0.0
  %523 = vmatprep.subr.mxu0 0.0
  %524 = vmatpush1.msra.mxu0 0.0
  %525 = vmatprep.subr.mxu0 0.0
  %526 = vmatpush1.msra.mxu0 0.0
  %527 = vmatprep.subr.mxu0 0.0
  %528 = vmatpush1.msra.mxu0 0.0
  %529 = vmatprep.subr.mxu0 0.0
  %530 = vmatpush1.msra.mxu0 0.0
  %531 = vmatprep.subr.mxu0 0.0
  %532 = vmatpush1.msra.mxu0 0.0
  %533 = vmatprep.subr.mxu0 0.0
  %534 = vmatpush1.msra.mxu0 0.0
  %535 = vmatprep.subr.mxu0 0.0
  %536 = vmatpush1.msra.mxu0 0.0
  %537 = vmatprep.subr.mxu0 0.0
  %538 = vmatpush1.msra.mxu0 0.0
  %539 = vmatprep.subr.mxu0 0.0
  %540 = vmatpush1.msra.mxu0 0.0
  %541 = vmatprep.subr.mxu0 0.0
  %542 = vmatpush1.msra.mxu0 0.0
  %543 = vmatprep.subr.mxu0 0.0
  %544 = vmatpush1.msra.mxu0 0.0
  %545 = vmatprep.subr.mxu0 0.0
  %546 = vmatpush1.msra.mxu0 0.0
  %547 = vmatprep.subr.mxu0 0.0
  %548 = vmatpush1.msra.mxu0 0.0
  %549 = vmatprep.subr.mxu0 0.0
  %550 = vmatpush1.msra.mxu0 0.0
  %551 = vmatprep.subr.mxu0 0.0
  %552 = vmatpush1.msra.mxu0 0.0
  %553 = vmatprep.subr.mxu0 0.0
  %554 = vmatpush1.msra.mxu0 0.0
  %555 = vmatprep.subr.mxu0 0.0
  %556 = vmatpush1.msra.mxu0 0.0
  %557 = vmatprep.subr.mxu0 0.0
  %558 = vmatpush1.msra.mxu0 0.0
  %559 = vmatprep.mubr.f32.mxu0 0.0
  %560 = vmatmul.mubr.f32.gmra.mrb[0].mxu0 %v493
  %v561 = vpop.f32.mrb[0].mxu0
  %v562 = vadd.f32 0.0, %v561
  %v563 = vpop.f32.mrb[0].mxu0
  %564 = vdwg.mxu0
  %v565 = vadd.f32 %v72, %v562
  %v566 = vxor.u32 %v565, 2147483648
  %v567 = vmul.f32 %v566, 1.442695
  %v568 = vpow.pop %v567
  %v569 = vadd.f32 %v568, 1.0
  %v570 = vrcp.pop %v569
  %v571 = vmul.f32 1.0, %v570
  %v572 = vtanh.pop %v565
  %v573 = vmul.f32 %v571, %v483
  %575 = vrot.lane.b32.xlu0 %v572, 64
  %v576 = vpop.permute.xlu0 %575
  %v578 = vmul.f32 %v571, %v576
  %580 = vrot.lane.b32.xlu0 %v578, 32
  %v581 = vpop.permute.xlu0 %580
  %v583 = vadd.f32 %v573, %v581
  %v584 = vtanh.pop %v583
  %586 = vrot.lane.b32.xlu0 %v584, 64
  %v587 = vpop.permute.xlu0 %586
  %v589 = vmul.f32 %v571, %v587
  %591 = vrot.lane.b32.xlu0 %v589, 32
  %v592 = vpop.permute.xlu0 %591
  %v593 = vsel %vm91, %v592, 0
  %595 = vmatprep.subr.mxu0 0.0
  %596 = vmatpush1.msra.mxu0 %v26
  %597 = vmatprep.subr.mxu0 0.0
  %598 = vmatpush1.msra.mxu0 %v27
  %599 = vmatprep.subr.mxu0 0.0
  %600 = vmatpush1.msra.mxu0 %v28
  %601 = vmatprep.subr.mxu0 0.0
  %602 = vmatpush1.msra.mxu0 %v29
  %603 = vmatprep.subr.mxu0 0.0
  %604 = vmatpush1.msra.mxu0 0.0
  %605 = vmatprep.subr.mxu0 0.0
  %606 = vmatpush1.msra.mxu0 0.0
  %607 = vmatprep.subr.mxu0 0.0
  %608 = vmatpush1.msra.mxu0 0.0
  %609 = vmatprep.subr.mxu0 0.0
  %610 = vmatpush1.msra.mxu0 0.0
  %611 = vmatprep.subr.mxu0 0.0
  %612 = vmatpush1.msra.mxu0 0.0
  %613 = vmatprep.subr.mxu0 0.0
  %614 = vmatpush1.msra.mxu0 0.0
  %615 = vmatprep.subr.mxu0 0.0
  %616 = vmatpush1.msra.mxu0 0.0
  %617 = vmatprep.subr.mxu0 0.0
  %618 = vmatpush1.msra.mxu0 0.0
  %619 = vmatprep.subr.mxu0 0.0
  %620 = vmatpush1.msra.mxu0 0.0
  %621 = vmatprep.subr.mxu0 0.0
  %622 = vmatpush1.msra.mxu0 0.0
  %623 = vmatprep.subr.mxu0 0.0
  %624 = vmatpush1.msra.mxu0 0.0
  %625 = vmatprep.subr.mxu0 0.0
  %626 = vmatpush1.msra.mxu0 0.0
  %627 = vmatprep.subr.mxu0 0.0
  %628 = vmatpush1.msra.mxu0 0.0
  %629 = vmatprep.subr.mxu0 0.0
  %630 = vmatpush1.msra.mxu0 0.0
  %631 = vmatprep.subr.mxu0 0.0
  %632 = vmatpush1.msra.mxu0 0.0
  %633 = vmatprep.subr.mxu0 0.0
  %634 = vmatpush1.msra.mxu0 0.0
  %635 = vmatprep.subr.mxu0 0.0
  %636 = vmatpush1.msra.mxu0 0.0
  %637 = vmatprep.subr.mxu0 0.0
  %638 = vmatpush1.msra.mxu0 0.0
  %639 = vmatprep.subr.mxu0 0.0
  %640 = vmatpush1.msra.mxu0 0.0
  %641 = vmatprep.subr.mxu0 0.0
  %642 = vmatpush1.msra.mxu0 0.0
  %643 = vmatprep.subr.mxu0 0.0
  %644 = vmatpush1.msra.mxu0 0.0
  %645 = vmatprep.subr.mxu0 0.0
  %646 = vmatpush1.msra.mxu0 0.0
  %647 = vmatprep.subr.mxu0 0.0
  %648 = vmatpush1.msra.mxu0 0.0
  %649 = vmatprep.subr.mxu0 0.0
  %650 = vmatpush1.msra.mxu0 0.0
  %651 = vmatprep.subr.mxu0 0.0
  %652 = vmatpush1.msra.mxu0 0.0
  %653 = vmatprep.subr.mxu0 0.0
  %654 = vmatpush1.msra.mxu0 0.0
  %655 = vmatprep.subr.mxu0 0.0
  %656 = vmatpush1.msra.mxu0 0.0
  %657 = vmatprep.subr.mxu0 0.0
  %658 = vmatpush1.msra.mxu0 0.0
  %659 = vmatprep.mubr.f32.mxu0 0.0
  %660 = vmatmul.mubr.f32.gmra.mrb[0].mxu0 %v593
  %v661 = vpop.f32.mrb[0].mxu0
  %v662 = vadd.f32 0.0, %v661
  %v663 = vpop.f32.mrb[0].mxu0
  %664 = vdwg.mxu0
  %v665 = vadd.f32 %v78, %v662
  %v666 = vxor.u32 %v665, 2147483648
  %v667 = vmul.f32 %v666, 1.442695
  %v668 = vpow.pop %v667
  %v669 = vadd.f32 %v668, 1.0
  %v670 = vrcp.pop %v669
  %v671 = vmul.f32 1.0, %v670
  %v672 = vtanh.pop %v665
  %v673 = vmul.f32 %v671, %v583
  %675 = vrot.lane.b32.xlu0 %v672, 64
  %v676 = vpop.permute.xlu0 %675
  %v678 = vmul.f32 %v671, %v676
  %680 = vrot.lane.b32.xlu0 %v678, 32
  %v681 = vpop.permute.xlu0 %680
  %v683 = vadd.f32 %v673, %v681
  %v684 = vtanh.pop %v683
  %686 = vrot.lane.b32.xlu0 %v684, 64
  %v687 = vpop.permute.xlu0 %686
  %v689 = vmul.f32 %v671, %v687
  %691 = vrot.lane.b32.xlu0 %v689, 32
  %v692 = vpop.permute.xlu0 %691
  %v693 = vsel %vm91, %v692, 0
  %695 = vmatprep.subr.mxu0 0.0
  %696 = vmatpush1.msra.mxu0 %v26
  %697 = vmatprep.subr.mxu0 0.0
  %698 = vmatpush1.msra.mxu0 %v27
  %699 = vmatprep.subr.mxu0 0.0
  %700 = vmatpush1.msra.mxu0 %v28
  %701 = vmatprep.subr.mxu0 0.0
  %702 = vmatpush1.msra.mxu0 %v29
  %703 = vmatprep.subr.mxu0 0.0
  %704 = vmatpush1.msra.mxu0 0.0
  %705 = vmatprep.subr.mxu0 0.0
  %706 = vmatpush1.msra.mxu0 0.0
  %707 = vmatprep.subr.mxu0 0.0
  %708 = vmatpush1.msra.mxu0 0.0
  %709 = vmatprep.subr.mxu0 0.0
  %710 = vmatpush1.msra.mxu0 0.0
  %711 = vmatprep.subr.mxu0 0.0
  %712 = vmatpush1.msra.mxu0 0.0
  %713 = vmatprep.subr.mxu0 0.0
  %714 = vmatpush1.msra.mxu0 0.0
  %715 = vmatprep.subr.mxu0 0.0
  %716 = vmatpush1.msra.mxu0 0.0
  %717 = vmatprep.subr.mxu0 0.0
  %718 = vmatpush1.msra.mxu0 0.0
  %719 = vmatprep.subr.mxu0 0.0
  %720 = vmatpush1.msra.mxu0 0.0
  %721 = vmatprep.subr.mxu0 0.0
  %722 = vmatpush1.msra.mxu0 0.0
  %723 = vmatprep.subr.mxu0 0.0
  %724 = vmatpush1.msra.mxu0 0.0
  %725 = vmatprep.subr.mxu0 0.0
  %726 = vmatpush1.msra.mxu0 0.0
  %727 = vmatprep.subr.mxu0 0.0
  %728 = vmatpush1.msra.mxu0 0.0
  %729 = vmatprep.subr.mxu0 0.0
  %730 = vmatpush1.msra.mxu0 0.0
  %731 = vmatprep.subr.mxu0 0.0
  %732 = vmatpush1.msra.mxu0 0.0
  %733 = vmatprep.subr.mxu0 0.0
  %734 = vmatpush1.msra.mxu0 0.0
  %735 = vmatprep.subr.mxu0 0.0
  %736 = vmatpush1.msra.mxu0 0.0
  %737 = vmatprep.subr.mxu0 0.0
  %738 = vmatpush1.msra.mxu0 0.0
  %739 = vmatprep.subr.mxu0 0.0
  %740 = vmatpush1.msra.mxu0 0.0
  %741 = vmatprep.subr.mxu0 0.0
  %742 = vmatpush1.msra.mxu0 0.0
  %743 = vmatprep.subr.mxu0 0.0
  %744 = vmatpush1.msra.mxu0 0.0
  %745 = vmatprep.subr.mxu0 0.0
  %746 = vmatpush1.msra.mxu0 0.0
  %747 = vmatprep.subr.mxu0 0.0
  %748 = vmatpush1.msra.mxu0 0.0
  %749 = vmatprep.subr.mxu0 0.0
  %750 = vmatpush1.msra.mxu0 0.0
  %751 = vmatprep.subr.mxu0 0.0
  %752 = vmatpush1.msra.mxu0 0.0
  %753 = vmatprep.subr.mxu0 0.0
  %754 = vmatpush1.msra.mxu0 0.0
  %755 = vmatprep.subr.mxu0 0.0
  %756 = vmatpush1.msra.mxu0 0.0
  %757 = vmatprep.subr.mxu0 0.0
  %758 = vmatpush1.msra.mxu0 0.0
  %759 = vmatprep.mubr.f32.mxu0 0.0
  %760 = vmatmul.mubr.f32.gmra.mrb[0].mxu0 %v693
  %v761 = vpop.f32.mrb[0].mxu0
  %v762 = vadd.f32 0.0, %v761
  %v763 = vpop.f32.mrb[0].mxu0
  %764 = vdwg.mxu0
  %v765 = vadd.f32 %v84, %v762
  %v766 = vxor.u32 %v765, 2147483648
  %v767 = vmul.f32 %v766, 1.442695
  %v768 = vpow.pop %v767
  %v769 = vadd.f32 %v768, 1.0
  %v770 = vrcp.pop %v769
  %v771 = vmul.f32 1.0, %v770
  %v772 = vtanh.pop %v765
  %v773 = vmul.f32 %v771, %v683
  %775 = vrot.lane.b32.xlu0 %v772, 64
  %v776 = vpop.permute.xlu0 %775
  %v778 = vmul.f32 %v771, %v776
  %780 = vrot.lane.b32.xlu0 %v778, 32
  %v781 = vpop.permute.xlu0 %780
  %v783 = vadd.f32 %v773, %v781
  %v784 = vtanh.pop %v783
  %786 = vrot.lane.b32.xlu0 %v784, 64
  %v787 = vpop.permute.xlu0 %786
  %v789 = vmul.f32 %v771, %v787
  %791 = vrot.lane.b32.xlu0 %v789, 32
  %v792 = vpop.permute.xlu0 %791
  %v793 = vsel %vm91, %v792, 0
  %795 = vmatprep.subr.mxu0 0.0
  %796 = vmatpush1.msra.mxu0 %v26
  %797 = vmatprep.subr.mxu0 0.0
  %798 = vmatpush1.msra.mxu0 %v27
  %799 = vmatprep.subr.mxu0 0.0
  %800 = vmatpush1.msra.mxu0 %v28
  %801 = vmatprep.subr.mxu0 0.0
  %802 = vmatpush1.msra.mxu0 %v29
  %803 = vmatprep.subr.mxu0 0.0
  %804 = vmatpush1.msra.mxu0 0.0
  %805 = vmatprep.subr.mxu0 0.0
  %806 = vmatpush1.msra.mxu0 0.0
  %807 = vmatprep.subr.mxu0 0.0
  %808 = vmatpush1.msra.mxu0 0.0
  %809 = vmatprep.subr.mxu0 0.0
  %810 = vmatpush1.msra.mxu0 0.0
  %811 = vmatprep.subr.mxu0 0.0
  %812 = vmatpush1.msra.mxu0 0.0
  %813 = vmatprep.subr.mxu0 0.0
  %814 = vmatpush1.msra.mxu0 0.0
  %815 = vmatprep.subr.mxu0 0.0
  %816 = vmatpush1.msra.mxu0 0.0
  %817 = vmatprep.subr.mxu0 0.0
  %818 = vmatpush1.msra.mxu0 0.0
  %819 = vmatprep.subr.mxu0 0.0
  %820 = vmatpush1.msra.mxu0 0.0
  %821 = vmatprep.subr.mxu0 0.0
  %822 = vmatpush1.msra.mxu0 0.0
  %823 = vmatprep.subr.mxu0 0.0
  %824 = vmatpush1.msra.mxu0 0.0
  %825 = vmatprep.subr.mxu0 0.0
  %826 = vmatpush1.msra.mxu0 0.0
  %827 = vmatprep.subr.mxu0 0.0
  %828 = vmatpush1.msra.mxu0 0.0
  %829 = vmatprep.subr.mxu0 0.0
  %830 = vmatpush1.msra.mxu0 0.0
  %831 = vmatprep.subr.mxu0 0.0
  %832 = vmatpush1.msra.mxu0 0.0
  %833 = vmatprep.subr.mxu0 0.0
  %834 = vmatpush1.msra.mxu0 0.0
  %835 = vmatprep.subr.mxu0 0.0
  %836 = vmatpush1.msra.mxu0 0.0
  %837 = vmatprep.subr.mxu0 0.0
  %838 = vmatpush1.msra.mxu0 0.0
  %839 = vmatprep.subr.mxu0 0.0
  %840 = vmatpush1.msra.mxu0 0.0
  %841 = vmatprep.subr.mxu0 0.0
  %842 = vmatpush1.msra.mxu0 0.0
  %843 = vmatprep.subr.mxu0 0.0
  %844 = vmatpush1.msra.mxu0 0.0
  %845 = vmatprep.subr.mxu0 0.0
  %846 = vmatpush1.msra.mxu0 0.0
  %847 = vmatprep.subr.mxu0 0.0
  %848 = vmatpush1.msra.mxu0 0.0
  %849 = vmatprep.subr.mxu0 0.0
  %850 = vmatpush1.msra.mxu0 0.0
  %851 = vmatprep.subr.mxu0 0.0
  %852 = vmatpush1.msra.mxu0 0.0
  %853 = vmatprep.subr.mxu0 0.0
  %854 = vmatpush1.msra.mxu0 0.0
  %855 = vmatprep.subr.mxu0 0.0
  %856 = vmatpush1.msra.mxu0 0.0
  %857 = vmatprep.subr.mxu0 0.0
  %858 = vmatpush1.msra.mxu0 0.0
  %859 = vmatprep.mubr.f32.mxu0 0.0
  %860 = vmatmul.mubr.f32.gmra.mrb[0].mxu0 %v793
  %v861 = vpop.f32.mrb[0].mxu0
  %v862 = vadd.f32 0.0, %v861
  %v863 = vpop.f32.mrb[0].mxu0
  %864 = vdwg.mxu0
  %v865 = vadd.f32 %v90, %v862
  %v866 = vxor.u32 %v865, 2147483648
  %v867 = vmul.f32 %v866, 1.442695
  %v868 = vpow.pop %v867
  %v869 = vadd.f32 %v868, 1.0
  %v870 = vrcp.pop %v869
  %v871 = vmul.f32 1.0, %v870
  %v872 = vtanh.pop %v865
  %v873 = vmul.f32 %v871, %v783
  %875 = vrot.lane.b32.xlu0 %v872, 64
  %v876 = vpop.permute.xlu0 %875
  %v878 = vmul.f32 %v871, %v876
  %880 = vrot.lane.b32.xlu0 %v878, 32
  %v881 = vpop.permute.xlu0 %880
  %v883 = vadd.f32 %v873, %v881
  %v884 = vtanh.pop %v883
  %886 = vrot.lane.b32.xlu0 %v884, 64
  %v887 = vpop.permute.xlu0 %886
  %v889 = vmul.f32 %v871, %v887
  %v890 = vld [vmem:[%s4] sm:$0xff]
  %v891 = vld [vmem:[%s4 + $0x8] sm:$0xff]
  %v892 = vld [vmem:[%s4 + $0x10] sm:$0xff]
  %v893 = vld [vmem:[%s4 + $0x18] sm:$0xff]
  %v894 = vld [vmem:[%s5] sm:$0x1]
  %v896 = vlaneseq
  %v897 = vshrl.u32 %v896, 7
  %v898 = vsub.s32 0, %v897
  %v899 = vrot.slane %v894, %v898
  %902 = vrot.lane.b32.xlu0 %v889, 32
  %v903 = vpop.permute.xlu0 %902
  %v904 = vsel %vm91, %v903, 0
  %906 = vmatprep.subr.mxu0 0.0
  %907 = vmatpush1.msra.mxu0 %v890
  %908 = vmatprep.subr.mxu0 0.0
  %909 = vmatpush1.msra.mxu0 %v891
  %910 = vmatprep.subr.mxu0 0.0
  %911 = vmatpush1.msra.mxu0 %v892
  %912 = vmatprep.subr.mxu0 0.0
  %913 = vmatpush1.msra.mxu0 %v893
  %914 = vmatprep.subr.mxu0 0.0
  %915 = vmatpush1.msra.mxu0 0.0
  %916 = vmatprep.subr.mxu0 0.0
  %917 = vmatpush1.msra.mxu0 0.0
  %918 = vmatprep.subr.mxu0 0.0
  %919 = vmatpush1.msra.mxu0 0.0
  %920 = vmatprep.subr.mxu0 0.0
  %921 = vmatpush1.msra.mxu0 0.0
  %922 = vmatprep.subr.mxu0 0.0
  %923 = vmatpush1.msra.mxu0 0.0
  %924 = vmatprep.subr.mxu0 0.0
  %925 = vmatpush1.msra.mxu0 0.0
  %926 = vmatprep.subr.mxu0 0.0
  %927 = vmatpush1.msra.mxu0 0.0
  %928 = vmatprep.subr.mxu0 0.0
  %929 = vmatpush1.msra.mxu0 0.0
  %930 = vmatprep.subr.mxu0 0.0
  %931 = vmatpush1.msra.mxu0 0.0
  %932 = vmatprep.subr.mxu0 0.0
  %933 = vmatpush1.msra.mxu0 0.0
  %934 = vmatprep.subr.mxu0 0.0
  %935 = vmatpush1.msra.mxu0 0.0
  %936 = vmatprep.subr.mxu0 0.0
  %937 = vmatpush1.msra.mxu0 0.0
  %938 = vmatprep.subr.mxu0 0.0
  %939 = vmatpush1.msra.mxu0 0.0
  %940 = vmatprep.subr.mxu0 0.0
  %941 = vmatpush1.msra.mxu0 0.0
  %942 = vmatprep.subr.mxu0 0.0
  %943 = vmatpush1.msra.mxu0 0.0
  %944 = vmatprep.subr.mxu0 0.0
  %945 = vmatpush1.msra.mxu0 0.0
  %946 = vmatprep.subr.mxu0 0.0
  %947 = vmatpush1.msra.mxu0 0.0
  %948 = vmatprep.subr.mxu0 0.0
  %949 = vmatpush1.msra.mxu0 0.0
  %950 = vmatprep.subr.mxu0 0.0
  %951 = vmatpush1.msra.mxu0 0.0
  %952 = vmatprep.subr.mxu0 0.0
  %953 = vmatpush1.msra.mxu0 0.0
  %954 = vmatprep.subr.mxu0 0.0
  %955 = vmatpush1.msra.mxu0 0.0
  %956 = vmatprep.subr.mxu0 0.0
  %957 = vmatpush1.msra.mxu0 0.0
  %958 = vmatprep.subr.mxu0 0.0
  %959 = vmatpush1.msra.mxu0 0.0
  %960 = vmatprep.subr.mxu0 0.0
  %961 = vmatpush1.msra.mxu0 0.0
  %962 = vmatprep.subr.mxu0 0.0
  %963 = vmatpush1.msra.mxu0 0.0
  %964 = vmatprep.subr.mxu0 0.0
  %965 = vmatpush1.msra.mxu0 0.0
  %966 = vmatprep.subr.mxu0 0.0
  %967 = vmatpush1.msra.mxu0 0.0
  %968 = vmatprep.subr.mxu0 0.0
  %969 = vmatpush1.msra.mxu0 0.0
  %970 = vmatprep.mubr.f32.mxu0 0.0
  %971 = vmatmul.mubr.f32.gmra.mrb[0].mxu0 %v904
  %v972 = vpop.f32.mrb[0].mxu0
  %v973 = vadd.f32 %v899, %v972
  %v974 = vpop.f32.mrb[0].mxu0
  %975 = vdwg.mxu0
  %v976 = vlaneseq
  %v977 = vand.u32 %v976, 127
  %vm978 = vcmp.eq.s32.totalorder %v977, 2
  %v979 = vxor.u32 %v973, 2147483648
  %v980 = vmul.f32 %v979, 1.442695
  %v981 = vpow.pop %v980
  %v982 = vadd.f32 %v981, 1.0
  %v983 = vrcp.pop %v982
  %v984 = vmul.f32 1.0, %v983
  %v985 = vsel %vm978, %v984, %v973
  %vm986 = vcmask 23552
  %987 = vst.msk [vmem:[%s6] sm:$0xff] %vm986, %v985
  // Predicated region
  $region26: #{tpu_custom_call.1} parent=0 // pred_check
    _
  $region27: #{tpu_custom_call.1} parent=0 // pred_check_branch
    %989 = sbr.rel (0) target = $region29
  $region28: #{tpu_custom_call.1} parent=0 // pred_region
    _
  $region29: #{tpu_custom_call.1} parent=0 // pred_fallthru
    _
  // Predicated region
  $region30: #{tpu_custom_call.1} parent=0 // pred_check
    _
  $region31: #{tpu_custom_call.1} parent=0 // pred_check_branch
    %991 = sbr.rel (0) target = $region33
  $region32: #{tpu_custom_call.1} parent=0 // pred_region
    _
  $region33: #{tpu_custom_call.1} parent=0 // pred_fallthru
    _

</llo_original>
